<compile_context>
chip_gen: v6e
topology: v6e:2x2x1
jax: 0.10.0
libtpu: 0.0.40
codegen_flags: <defaults>
</compile_context>

<pallas_src>
import functools

import jax
import jax.numpy as jnp
from jax.experimental import pallas as pl
from jax.experimental.pallas import tpu as pltpu


# ----------------------------------------------------------------------------
# Pallas kernel: fused per-group MLP (1x1 conv + folded BN + ReLU) x2 + max-pool
# over the neighbourhood (nsample) axis, with a lane-dense packed output store.
# ----------------------------------------------------------------------------
def _sa_mlp_kernel(x_ref, w1_ref, t1_ref, w2_ref, t2_ref, o_ref, *, nsample):
    # x_ref : [gb*ns, cin] bf16 (channels-last), contiguous per block
    # w*    : bf16 conv weights with BN scale pre-folded
    # t*    : f32 (1, c) folded BN shift
    # o_ref : [gb//pack, pack*c2] f32 (pack groups side by side on the lane axis)
    rows = x_ref.shape[0]
    gb = rows // nsample
    c2 = w2_ref.shape[1]
    q, packed_c = o_ref.shape
    pack = packed_c // c2

    # layer 1: 1x1 conv == channel matmul on the MXU (f32 accumulation) + BN shift + ReLU
    h = jnp.dot(x_ref[...], w1_ref[...], preferred_element_type=jnp.float32)
    h = jnp.maximum(h + t1_ref[...], 0.0)

    # layer 2 (cast MXU operand to bf16, keep elementwise math in f32)
    h = jnp.dot(h.astype(w2_ref.dtype), w2_ref[...], preferred_element_type=jnp.float32)
    h = jnp.maximum(h + t2_ref[...], 0.0)                      # [gb*ns, c2] f32

    # torch.max(new_points, 2)[0]: max over the nsample axis.
    # Leading-dim split only (lane dim unchanged) -> layout no-op reshape.
    hmax = jnp.max(h.reshape(gb, nsample, c2), axis=1)         # [gb, c2]

    # Pack `pack` tile-aligned group chunks along the 128-lane axis so the store
    # is a dense 128-wide vst instead of masked 32-wide partial stores.
    if pack > 1:
        hmax = jnp.concatenate(
            [hmax[p * q:(p + 1) * q, :] for p in range(pack)], axis=-1)
    o_ref[...] = hmax


def sa_mlp_pallas(x_gsc, layer_params, *, group_block=1024):
    """x_gsc: [G, nsample, C_in] float32 -> [G, C_out_last] float32."""
    G, ns, cin = x_gsc.shape
    (w1, t1), (w2, t2) = layer_params       # BN scale already folded into w*
    c2 = w2.shape[1]

    # Lane-dense output packing factor (pack groups per 128-lane output row).
    pack = 128 // c2 if (c2 < 128 and 128 % c2 == 0) else 1
    align = 8 * pack                         # keep q = gb // pack a multiple of 8 sublanes

    # Block size: as large as requested, aligned, never larger than the (aligned) problem,
    # and capped so that we get >= 2 grid steps when possible (v7x megacore).
    gb = min(group_block, pl.cdiv(G, align) * align)
    gb = max(align, (gb // align) * align)
    gb = min(gb, max(align, pl.cdiv(pl.cdiv(G, 2), align) * align))

    n_blocks = pl.cdiv(G, gb)
    G_pad = n_blocks * gb
    if G_pad != G:
        x_gsc = jnp.pad(x_gsc, ((0, G_pad - G), (0, 0), (0, 0)))

    # Channels-last 2-D slab (reshape is free in XLA); bf16 operands for the MXU.
    x2 = x_gsc.reshape(G_pad * ns, cin).astype(jnp.bfloat16)
    w1b = w1.astype(jnp.bfloat16)
    w2b = w2.astype(jnp.bfloat16)

    q = gb // pack
    kernel = functools.partial(_sa_mlp_kernel, nsample=ns)

    out = pl.pallas_call(
        kernel,
        out_shape=jax.ShapeDtypeStruct((n_blocks * q, pack * c2), jnp.float32),
        grid_spec=pltpu.PrefetchScalarGridSpec(
            num_scalar_prefetch=0,
            grid=(n_blocks,),
            in_specs=[
                pl.BlockSpec((gb * ns, cin), lambda i: (i, 0)),
                pl.BlockSpec(w1b.shape, lambda i: (0, 0)),
                pl.BlockSpec(t1.shape, lambda i: (0, 0)),
                pl.BlockSpec(w2b.shape, lambda i: (0, 0)),
                pl.BlockSpec(t2.shape, lambda i: (0, 0)),
            ],
            out_specs=pl.BlockSpec((q, pack * c2), lambda i: (i, 0)),
        ),
        compiler_params=pltpu.CompilerParams(
            dimension_semantics=("parallel",)),
    )(x2, w1b, t1, w2b, t2)

    # Undo the per-block lane packing: out[i*q + r, p*c2 + c] holds group i*gb + p*q + r.
    feat = (out.reshape(n_blocks, q, pack, c2)
               .transpose(0, 2, 1, 3)
               .reshape(G_pad, c2))
    return feat[:G]


# ----------------------------------------------------------------------------
# Plain-JAX glue: furthest point sampling, ball query, gathers (data dependent)
# ----------------------------------------------------------------------------
def square_distance(src, dst):
    # src [B,S,3], dst [B,N,3] -> [B,S,N]
    return jnp.sum((src[:, :, None, :] - dst[:, None, :, :]) ** 2, axis=-1)


def index_points(points, idx):
    # points [B,N,C], idx [B, ...] int -> [B, ..., C]
    B = points.shape[0]
    batch = jnp.arange(B).reshape((B,) + (1,) * (idx.ndim - 1))
    return points[batch, idx]


def furthest_point_sample(xyz, npoint):
    # deterministic FPS starting from point index 0 (matches the pointnet2 CUDA op);
    # inherently an O(npoint) sequential argmax loop.
    B, N, _ = xyz.shape

    def body(i, state):
        centroids, distance, farthest = state
        centroids = centroids.at[:, i].set(farthest)
        centroid = jnp.take_along_axis(xyz, farthest[:, None, None], axis=1)  # [B,1,3]
        dist = jnp.sum((xyz - centroid) ** 2, axis=-1)                        # [B,N]
        distance = jnp.minimum(distance, dist)
        farthest = jnp.argmax(distance, axis=-1).astype(jnp.int32)
        return centroids, distance, farthest

    centroids = jnp.zeros((B, npoint), jnp.int32)
    distance = jnp.full((B, N), 1e10, jnp.float32)
    farthest = jnp.zeros((B,), jnp.int32)
    centroids, _, _ = jax.lax.fori_loop(0, npoint, body, (centroids, distance, farthest))
    return centroids


def ball_query(min_radius, max_radius, nsample, xyz, new_xyz):
    B, N, _ = xyz.shape
    S = new_xyz.shape[1]
    sqrdists = square_distance(new_xyz, xyz)                                  # [B,S,N]
    group_idx = jnp.broadcast_to(jnp.arange(N, dtype=jnp.int32), (B, S, N))
    invalid = (sqrdists > max_radius ** 2) | (sqrdists < min_radius ** 2)
    group_idx = jnp.where(invalid, N, group_idx)
    # nsample lowest-index valid neighbours: top_k on the negation instead of a full sort
    group_idx = -jax.lax.top_k(-group_idx, nsample)[0]
    group_first = jnp.broadcast_to(group_idx[:, :, :1], group_idx.shape)
    group_idx = jnp.where(group_idx == N, group_first, group_idx)
    return jnp.minimum(group_idx, N - 1)


def sample_and_group(npoint, min_radius, max_radius, nsample, xyz, points):
    B, N, C = xyz.shape
    S = npoint
    fps_idx = furthest_point_sample(xyz, npoint)                     # [B,S]
    new_xyz = index_points(xyz, fps_idx)                             # [B,S,3]
    idx = ball_query(min_radius, max_radius, nsample, xyz, new_xyz)  # [B,S,nsample]
    grouped_xyz = index_points(xyz, idx)                             # [B,S,nsample,3]
    grouped_xyz_norm = grouped_xyz - new_xyz.reshape(B, S, 1, C)
    if points is not None:
        grouped_points = index_points(points, idx)
        new_points = jnp.concatenate([grouped_xyz_norm, grouped_points], axis=-1)
    else:
        new_points = grouped_xyz_norm
    return new_xyz, new_points


# ----------------------------------------------------------------------------
# Module-equivalent forward
# ----------------------------------------------------------------------------
def init_sa_params(key, in_channel, mlp):
    """Deterministic Conv2d(1x1)+BatchNorm2d params with the eval-mode BN
    (running_mean=0, running_var=1) folded directly into the conv weights and
    a per-channel shift: BN(conv(x)) == x @ (w*s) + ((b - mean)*s + beta)."""
    params = []
    last = in_channel
    eps = 1e-5
    for out in mlp:
        key, k1, k2, k3, k4 = jax.random.split(key, 5)
        w = 0.1 * jax.random.normal(k1, (last, out), jnp.float32)   # conv weight (Cin,Cout)
        cb = 0.1 * jax.random.normal(k2, (out,), jnp.float32)       # conv bias
        gamma = 1.0 + 0.1 * jax.random.normal(k3, (out,), jnp.float32)
        beta = 0.1 * jax.random.normal(k4, (out,), jnp.float32)
        running_mean = jnp.zeros((out,), jnp.float32)
        running_var = jnp.ones((out,), jnp.float32)
        s = gamma / jnp.sqrt(running_var + eps)
        w_folded = w * s[None, :]                                    # fold BN scale into conv
        t = (cb - running_mean) * s + beta                           # folded shift
        params.append((w_folded, t.reshape(1, out)))
        last = out
    return params


def pointnet_set_abstraction_forward(xyz_bcn, points_bdn, params, *,
                                     npoint, min_radius, max_radius, nsample):
    """
    xyz_bcn:    [B, 3, N]
    points_bdn: [B, D, N]
    returns:    new_xyz [B, 3, S],  new_points [B, C_out_last, S]
    """
    # TODO(synk): group_all=True path (sample_and_group_all) not implemented; the
    # provided module dependencies only include sample_and_group.
    # TODO(synk): the fused kernel is specialized to a 2-layer MLP (as configured here).
    xyz = jnp.transpose(xyz_bcn, (0, 2, 1))          # [B,N,3]
    points = jnp.transpose(points_bdn, (0, 2, 1))    # [B,N,D]
    new_xyz, new_points = sample_and_group(npoint, min_radius, max_radius,
                                           nsample, xyz, points)
    B, S, ns, C = new_points.shape
    x_gsc = new_points.reshape(B * S, ns, C).astype(jnp.float32)  # [G, nsample, C]

    feat = sa_mlp_pallas(x_gsc, params)              # [G, C_out_last]  (Pallas hot path)

    new_points_out = jnp.transpose(feat.reshape(B, S, -1), (0, 2, 1))  # [B, C_out, S]
    new_xyz_out = jnp.transpose(new_xyz, (0, 2, 1))                    # [B, 3, S]
    return new_xyz_out, new_points_out


if __name__ == "__main__":
    key = jax.random.PRNGKey(0)
    kx, kp, kw = jax.random.split(key, 3)

    B, N = 2, 64
    D = 5                    # input point feature channels
    npoint, nsample = 16, 8
    min_radius, max_radius = 0.0, 0.4
    in_channel = 3 + D       # grouped feature channels fed to the MLP
    mlp = [16, 32]

    xyz = jax.random.uniform(kx, (B, 3, N), jnp.float32)            # [B, C, N]
    points = jax.random.normal(kp, (B, D, N), jnp.float32)          # [B, D, N]
    params = init_sa_params(kw, in_channel, mlp)

    fwd = jax.jit(lambda a, b: pointnet_set_abstraction_forward(
        a, b, params, npoint=npoint, min_radius=min_radius,
        max_radius=max_radius, nsample=nsample))

    new_xyz, new_points = fwd(xyz, points)
    jax.block_until_ready((new_xyz, new_points))

    assert new_xyz.shape == (B, 3, npoint)
    assert new_points.shape == (B, mlp[-1], npoint)
    print("KERNEL_OK")
</pallas_src>

<mosaic_0001>
module attributes {stable_mosaic.version = 11 : i64} {
  func.func @_sa_mlp_kernel(%arg0: i32, %arg1: memref<256x8xbf16, #tpu.memory_space<vmem>>, %arg2: memref<8x16xbf16, #tpu.memory_space<vmem>>, %arg3: memref<1x16xf32, #tpu.memory_space<vmem>>, %arg4: memref<16x32xbf16, #tpu.memory_space<vmem>>, %arg5: memref<1x32xf32, #tpu.memory_space<vmem>>, %arg6: memref<8x128xf32, #tpu.memory_space<vmem>>) attributes {dimension_semantics = [#tpu.dimension_semantics<parallel>], iteration_bounds = array<i64: 1>, scalar_prefetch = 0 : i64, scratch_operands = 0 : i64, tpu.core_type = #tpu.core_type<tc>, window_params = [{transform_indices = @transform_0, window_bounds = array<i64: 256, 8>}, {pipeline_mode = #tpu.pipeline_mode<synchronous>, transform_indices = @transform_1, window_bounds = array<i64: 8, 16>}, {pipeline_mode = #tpu.pipeline_mode<synchronous>, transform_indices = @transform_2, window_bounds = array<i64: 1, 16>}, {pipeline_mode = #tpu.pipeline_mode<synchronous>, transform_indices = @transform_3, window_bounds = array<i64: 16, 32>}, {pipeline_mode = #tpu.pipeline_mode<synchronous>, transform_indices = @transform_4, window_bounds = array<i64: 1, 32>}, {transform_indices = @transform_5, window_bounds = array<i64: 8, 128>}]} {
    %c0 = arith.constant 0 : index
    %c0_0 = arith.constant 0 : index
    %0 = vector.load %arg1[%c0, %c0_0] : memref<256x8xbf16, #tpu.memory_space<vmem>>, vector<256x8xbf16>
    %c0_1 = arith.constant 0 : index
    %c0_2 = arith.constant 0 : index
    %1 = vector.load %arg2[%c0_1, %c0_2] : memref<8x16xbf16, #tpu.memory_space<vmem>>, vector<8x16xbf16>
    %cst = arith.constant dense<0.000000e+00> : vector<256x16xf32>
    %2 = tpu.matmul %0, %1, %cst {dimension_numbers = #tpu.dot_dimension_numbers<[1], [0], [0], [1], [0, 0, 1, 1], [], []>} : vector<256x8xbf16>, vector<8x16xbf16>, vector<256x16xf32> -> vector<256x16xf32>
    %c0_3 = arith.constant 0 : index
    %c0_4 = arith.constant 0 : index
    %3 = vector.load %arg3[%c0_3, %c0_4] : memref<1x16xf32, #tpu.memory_space<vmem>>, vector<1x16xf32>
    %4 = vector.broadcast %3 : vector<1x16xf32> to vector<256x16xf32>
    %5 = arith.addf %2, %4 : vector<256x16xf32>
    %cst_5 = arith.constant 0.000000e+00 : f32
    %6 = vector.broadcast %cst_5 : f32 to vector<256x16xf32>
    %7 = arith.maximumf %5, %6 : vector<256x16xf32>
    %8 = arith.truncf %7 : vector<256x16xf32> to vector<256x16xbf16>
    %c0_6 = arith.constant 0 : index
    %c0_7 = arith.constant 0 : index
    %9 = vector.load %arg4[%c0_6, %c0_7] : memref<16x32xbf16, #tpu.memory_space<vmem>>, vector<16x32xbf16>
    %cst_8 = arith.constant dense<0.000000e+00> : vector<256x32xf32>
    %10 = tpu.matmul %8, %9, %cst_8 {dimension_numbers = #tpu.dot_dimension_numbers<[1], [0], [0], [1], [0, 0, 1, 1], [], []>} : vector<256x16xbf16>, vector<16x32xbf16>, vector<256x32xf32> -> vector<256x32xf32>
    %c0_9 = arith.constant 0 : index
    %c0_10 = arith.constant 0 : index
    %11 = vector.load %arg5[%c0_9, %c0_10] : memref<1x32xf32, #tpu.memory_space<vmem>>, vector<1x32xf32>
    %12 = vector.broadcast %11 : vector<1x32xf32> to vector<256x32xf32>
    %13 = arith.addf %10, %12 : vector<256x32xf32>
    %cst_11 = arith.constant 0.000000e+00 : f32
    %14 = vector.broadcast %cst_11 : f32 to vector<256x32xf32>
    %15 = arith.maximumf %13, %14 : vector<256x32xf32>
    %16 = vector.shape_cast %15 : vector<256x32xf32> to vector<32x8x32xf32>
    %cst_12 = arith.constant dense<0xFF800000> : vector<32x32xf32>
    %17 = vector.multi_reduction <maximumf>, %16, %cst_12 [1] : vector<32x8x32xf32> to vector<32x32xf32>
    %18 = vector.extract_strided_slice %17 {offsets = [0, 0], sizes = [8, 32], strides = [1, 1]} : vector<32x32xf32> to vector<8x32xf32>
    %19 = vector.extract_strided_slice %17 {offsets = [8, 0], sizes = [8, 32], strides = [1, 1]} : vector<32x32xf32> to vector<8x32xf32>
    %20 = vector.extract_strided_slice %17 {offsets = [16, 0], sizes = [8, 32], strides = [1, 1]} : vector<32x32xf32> to vector<8x32xf32>
    %21 = vector.extract_strided_slice %17 {offsets = [24, 0], sizes = [8, 32], strides = [1, 1]} : vector<32x32xf32> to vector<8x32xf32>
    %22 = tpu.concatenate %18, %19, %20, %21 in 1 : vector<8x32xf32>, vector<8x32xf32>, vector<8x32xf32>, vector<8x32xf32> -> vector<8x128xf32>
    %c0_13 = arith.constant 0 : index
    %c0_14 = arith.constant 0 : index
    %23 = vector.load %arg6[%c0_13, %c0_14] : memref<8x128xf32, #tpu.memory_space<vmem>>, vector<8x128xf32>
    tpu.vector_store %arg6[%c0_13, %c0_14], %22 {strides = array<i32>} : memref<8x128xf32, #tpu.memory_space<vmem>>, vector<8x128xf32>,
    return
  }
  func.func @transform_0(%arg0: i32) -> (i32, i32) {
    %c0_i32 = arith.constant 0 : i32
    %c0_i32_0 = arith.constant 0 : i32
    return %arg0, %c0_i32 : i32, i32
  }
  func.func @transform_1(%arg0: i32) -> (i32, i32) {
    %c0_i32 = arith.constant 0 : i32
    %c0_i32_0 = arith.constant 0 : i32
    %c0_i32_1 = arith.constant 0 : i32
    return %c0_i32, %c0_i32_0 : i32, i32
  }
  func.func @transform_2(%arg0: i32) -> (i32, i32) {
    %c0_i32 = arith.constant 0 : i32
    %c0_i32_0 = arith.constant 0 : i32
    %c0_i32_1 = arith.constant 0 : i32
    return %c0_i32, %c0_i32_0 : i32, i32
  }
  func.func @transform_3(%arg0: i32) -> (i32, i32) {
    %c0_i32 = arith.constant 0 : i32
    %c0_i32_0 = arith.constant 0 : i32
    %c0_i32_1 = arith.constant 0 : i32
    return %c0_i32, %c0_i32_0 : i32, i32
  }
  func.func @transform_4(%arg0: i32) -> (i32, i32) {
    %c0_i32 = arith.constant 0 : i32
    %c0_i32_0 = arith.constant 0 : i32
    %c0_i32_1 = arith.constant 0 : i32
    return %c0_i32, %c0_i32_0 : i32, i32
  }
  func.func @transform_5(%arg0: i32) -> (i32, i32) {
    %c0_i32 = arith.constant 0 : i32
    %c0_i32_0 = arith.constant 0 : i32
    return %arg0, %c0_i32 : i32, i32
  }
}

</mosaic_0001>

<llo_original>
// kernel: custom-call.8
$region0: #{custom-call.8}
  %s0 = inlined_call_operand.vmem [shape: f32[2,64], index: 0, kind: output, shape index: {}]

// kernel: _lambda_.1
$region0: #{_lambda_.1}
  #allocation0 [shape = 'u32[]', space=smem, size = 0x4, offset = 0x4, fixed_abs, tag = 'smem constant byte address 0x4 - core index']
  #allocation1 [shape = 'u32[144,128]{1,0:T(1,128)}', space=vmem, size = 0x12000, scoped, tag = 'internal scratch']
  %s0 = inlined_call_operand.vmem [shape: bf16[256,8], index: 0, kind: input, shape index: {}]
  %s1 = inlined_call_operand.vmem [shape: bf16[8,16], index: 1, kind: input, shape index: {}]
  %s2 = inlined_call_operand.vmem [shape: f32[1,16], index: 2, kind: input, shape index: {}]
  %s3 = inlined_call_operand.vmem [shape: bf16[16,32], index: 3, kind: input, shape index: {}]
  %s4 = inlined_call_operand.vmem [shape: f32[1,32], index: 4, kind: input, shape index: {}]
  %s5 = inlined_call_operand.vmem [shape: f32[8,128], index: 5, kind: output, shape index: {}]
  %s6 = sld [smem:[#allocation0]]
  $region30: #{_lambda_.1} parent=0
    _
  %s8 = ssub.s32 1, %s6
  %s9 = scalar_select 0, %s8, %s6
  // Predicated region
  $region2: #{_lambda_.1} parent=0 // pred_check
    _
  $region3: #{_lambda_.1} parent=0 // pred_check_branch
    %11 = sbr.rel (0) target = $region5
  $region4: #{_lambda_.1} parent=0 // pred_region
    _
  $region5: #{_lambda_.1} parent=0 // pred_fallthru
    _
  // Predicated region
  $region6: #{_lambda_.1} parent=0 // pred_check
    _
  $region7: #{_lambda_.1} parent=0 // pred_check_branch
    %13 = sbr.rel (0) target = $region9
  $region8: #{_lambda_.1} parent=0 // pred_region
    _
  $region9: #{_lambda_.1} parent=0 // pred_fallthru
    _
  // Predicated region
  $region10: #{_lambda_.1} parent=0 // pred_check
    _
  $region11: #{_lambda_.1} parent=0 // pred_check_branch
    %15 = sbr.rel (0) target = $region13
  $region12: #{_lambda_.1} parent=0 // pred_region
    _
  $region13: #{_lambda_.1} parent=0 // pred_fallthru
    _
  // Predicated region
  $region14: #{_lambda_.1} parent=0 // pred_check
    _
  $region15: #{_lambda_.1} parent=0 // pred_check_branch
    %17 = sbr.rel (0) target = $region17
  $region16: #{_lambda_.1} parent=0 // pred_region
    _
  $region17: #{_lambda_.1} parent=0 // pred_fallthru
    _
  // Predicated region
  $region18: #{_lambda_.1} parent=0 // pred_check
    _
  $region19: #{_lambda_.1} parent=0 // pred_check_branch
    %19 = sbr.rel (0) target = $region21
  $region20: #{_lambda_.1} parent=0 // pred_region
    _
  $region21: #{_lambda_.1} parent=0 // pred_fallthru
    _
  %v21 = vld [vmem:[%s0] sm:$0xf]
  %v22 = vld [vmem:[%s0 + $0x4] sm:$0xf]
  %v23 = vld [vmem:[%s0 + $0x8] sm:$0xf]
  %v24 = vld [vmem:[%s0 + $0xc] sm:$0xf]
  %v25 = vld [vmem:[%s0 + $0x10] sm:$0xf]
  %v26 = vld [vmem:[%s0 + $0x14] sm:$0xf]
  %v27 = vld [vmem:[%s0 + $0x18] sm:$0xf]
  %v28 = vld [vmem:[%s0 + $0x1c] sm:$0xf]
  %v29 = vld [vmem:[%s0 + $0x20] sm:$0xf]
  %v30 = vld [vmem:[%s0 + $0x24] sm:$0xf]
  %v31 = vld [vmem:[%s0 + $0x28] sm:$0xf]
  %v32 = vld [vmem:[%s0 + $0x2c] sm:$0xf]
  %v33 = vld [vmem:[%s0 + $0x30] sm:$0xf]
  %v34 = vld [vmem:[%s0 + $0x34] sm:$0xf]
  %v35 = vld [vmem:[%s0 + $0x38] sm:$0xf]
  %v36 = vld [vmem:[%s0 + $0x3c] sm:$0xf]
  %v37 = vld [vmem:[%s0 + $0x40] sm:$0xf]
  %v38 = vld [vmem:[%s0 + $0x44] sm:$0xf]
  %v39 = vld [vmem:[%s0 + $0x48] sm:$0xf]
  %v40 = vld [vmem:[%s0 + $0x4c] sm:$0xf]
  %v41 = vld [vmem:[%s0 + $0x50] sm:$0xf]
  %v42 = vld [vmem:[%s0 + $0x54] sm:$0xf]
  %v43 = vld [vmem:[%s0 + $0x58] sm:$0xf]
  %v44 = vld [vmem:[%s0 + $0x5c] sm:$0xf]
  %v45 = vld [vmem:[%s0 + $0x60] sm:$0xf]
  %v46 = vld [vmem:[%s0 + $0x64] sm:$0xf]
  %v47 = vld [vmem:[%s0 + $0x68] sm:$0xf]
  %v48 = vld [vmem:[%s0 + $0x6c] sm:$0xf]
  %v49 = vld [vmem:[%s0 + $0x70] sm:$0xf]
  %v50 = vld [vmem:[%s0 + $0x74] sm:$0xf]
  %v51 = vld [vmem:[%s0 + $0x78] sm:$0xf]
  %v52 = vld [vmem:[%s0 + $0x7c] sm:$0xf]
  %v53 = vld [vmem:[%s1] sm:$0xf]
  %v54 = vld [vmem:[%s2] sm:$0x1]
  %v56 = vlaneseq
  %v57 = vshrl.u32 %v56, 7
  %v58 = vsub.s32 0, %v57
  %v59 = vrot.slane %v54, %v58
  %v93 = vunpack.c.l.b16 %v21
  %v94 = vunpack.c.l.b16 %v22
  %v95 = vunpack.c.l.b16 %v23
  %v96 = vunpack.c.l.b16 %v24
  %v97 = vunpack.c.l.b16 %v25
  %v98 = vunpack.c.l.b16 %v26
  %v99 = vunpack.c.l.b16 %v27
  %v100 = vunpack.c.l.b16 %v28
  %v101 = vunpack.c.l.b16 %v29
  %v102 = vunpack.c.l.b16 %v30
  %v103 = vunpack.c.l.b16 %v31
  %v104 = vunpack.c.l.b16 %v32
  %v105 = vunpack.c.l.b16 %v33
  %v106 = vunpack.c.l.b16 %v34
  %v107 = vunpack.c.l.b16 %v35
  %v108 = vunpack.c.l.b16 %v36
  %v109 = vunpack.c.l.b16 %v37
  %v110 = vunpack.c.l.b16 %v38
  %v111 = vunpack.c.l.b16 %v39
  %v112 = vunpack.c.l.b16 %v40
  %v113 = vunpack.c.l.b16 %v41
  %v114 = vunpack.c.l.b16 %v42
  %v115 = vunpack.c.l.b16 %v43
  %v116 = vunpack.c.l.b16 %v44
  %v117 = vunpack.c.l.b16 %v45
  %v118 = vunpack.c.l.b16 %v46
  %v119 = vunpack.c.l.b16 %v47
  %v120 = vunpack.c.l.b16 %v48
  %v121 = vunpack.c.l.b16 %v49
  %v122 = vunpack.c.l.b16 %v50
  %v123 = vunpack.c.l.b16 %v51
  %v124 = vunpack.c.l.b16 %v52
  %v125 = vpack.c.b16 %v94, %v93
  %v126 = vpack.c.b16 %v96, %v95
  %v127 = vpack.c.b16 %v98, %v97
  %v128 = vpack.c.b16 %v100, %v99
  %v129 = vpack.c.b16 %v102, %v101
  %v130 = vpack.c.b16 %v104, %v103
  %v131 = vpack.c.b16 %v106, %v105
  %v132 = vpack.c.b16 %v108, %v107
  %v133 = vpack.c.b16 %v110, %v109
  %v134 = vpack.c.b16 %v112, %v111
  %v135 = vpack.c.b16 %v114, %v113
  %v136 = vpack.c.b16 %v116, %v115
  %v137 = vpack.c.b16 %v118, %v117
  %v138 = vpack.c.b16 %v120, %v119
  %v139 = vpack.c.b16 %v122, %v121
  %v140 = vpack.c.b16 %v124, %v123
  %vm141 = vcmask 64512
  %v143 = vsel %vm141, %v125, 0
  %v146 = vsel %vm141, %v126, 0
  %v149 = vsel %vm141, %v127, 0
  %v152 = vsel %vm141, %v128, 0
  %v155 = vsel %vm141, %v129, 0
  %v158 = vsel %vm141, %v130, 0
  %v161 = vsel %vm141, %v131, 0
  %v164 = vsel %vm141, %v132, 0
  %v167 = vsel %vm141, %v133, 0
  %v170 = vsel %vm141, %v134, 0
  %v173 = vsel %vm141, %v135, 0
  %v176 = vsel %vm141, %v136, 0
  %v179 = vsel %vm141, %v137, 0
  %v182 = vsel %vm141, %v138, 0
  %v185 = vsel %vm141, %v139, 0
  %v188 = vsel %vm141, %v140, 0
  %vm190 = vcmask 1043456
  %v192 = vsel %vm190, %v53, 0
  %194 = vmatprep.subr.bf16.mxu0 0
  %195 = vmatpush1.bf16.msra.mxu0 0
  %196 = vmatprep.subr.bf16.mxu0 0
  %197 = vmatpush1.bf16.msra.mxu0 0
  %198 = vmatprep.subr.bf16.mxu0 0
  %199 = vmatpush1.bf16.msra.mxu0 0
  %200 = vmatprep.subr.bf16.mxu0 0
  %201 = vmatpush1.bf16.msra.mxu0 0
  %202 = vmatprep.subr.bf16.mxu0 0
  %203 = vmatpush1.bf16.msra.mxu0 0
  %204 = vmatprep.subr.bf16.mxu0 0
  %205 = vmatpush1.bf16.msra.mxu0 0
  %206 = vmatprep.subr.bf16.mxu0 0
  %207 = vmatpush1.bf16.msra.mxu0 0
  %208 = vmatprep.subr.bf16.mxu0 0
  %209 = vmatpush1.bf16.msra.mxu0 %v192
  %210 = vmatprep.subr.bf16.mxu0 0
  %211 = vmatpush2.bf16.msra.mxu0 0
  %212 = vmatprep.subr.bf16.mxu0 0
  %213 = vmatpush2.bf16.msra.mxu0 0
  %214 = vmatprep.subr.bf16.mxu0 0
  %215 = vmatpush2.bf16.msra.mxu0 0
  %216 = vmatprep.subr.bf16.mxu0 0
  %217 = vmatpush2.bf16.msra.mxu0 0
  %218 = vmatprep.subr.bf16.mxu0 0
  %219 = vmatpush2.bf16.msra.mxu0 0
  %220 = vmatprep.subr.bf16.mxu0 0
  %221 = vmatpush2.bf16.msra.mxu0 0
  %222 = vmatprep.subr.bf16.mxu0 0
  %223 = vmatpush2.bf16.msra.mxu0 0
  %224 = vmatprep.subr.bf16.mxu0 0
  %225 = vmatpush2.bf16.msra.mxu0 0
  %226 = vmatprep.mubr.bf16.mxu0 0
  %227 = vmatmul.mubr.bf16.gmra.mxu0 %v143
  %v228 = vpop.f32.mrf.mxu0
  %v229 = vadd.f32 %v59, %v228
  %v230 = vpop.f32.mrf.mxu0
  %v231 = vpop.f32.mrf.mxu0
  %v232 = vadd.f32 %v59, %v231
  %v233 = vpop.f32.mrf.mxu0
  %234 = vmatprep.mubr.bf16.mxu0 0
  %235 = vmatmul.mubr.bf16.gmra.mxu0 %v146
  %v236 = vpop.f32.mrf.mxu0
  %v237 = vadd.f32 %v59, %v236
  %v238 = vpop.f32.mrf.mxu0
  %v239 = vpop.f32.mrf.mxu0
  %v240 = vadd.f32 %v59, %v239
  %v241 = vpop.f32.mrf.mxu0
  %242 = vmatprep.mubr.bf16.mxu0 0
  %243 = vmatmul.mubr.bf16.gmra.mxu0 %v149
  %v244 = vpop.f32.mrf.mxu0
  %v245 = vadd.f32 %v59, %v244
  %v246 = vpop.f32.mrf.mxu0
  %v247 = vpop.f32.mrf.mxu0
  %v248 = vadd.f32 %v59, %v247
  %v249 = vpop.f32.mrf.mxu0
  %250 = vmatprep.mubr.bf16.mxu0 0
  %251 = vmatmul.mubr.bf16.gmra.mxu0 %v152
  %v252 = vpop.f32.mrf.mxu0
  %v253 = vadd.f32 %v59, %v252
  %v254 = vpop.f32.mrf.mxu0
  %v255 = vpop.f32.mrf.mxu0
  %v256 = vadd.f32 %v59, %v255
  %v257 = vpop.f32.mrf.mxu0
  %258 = vmatprep.mubr.bf16.mxu0 0
  %259 = vmatmul.mubr.bf16.gmra.mxu0 %v155
  %v260 = vpop.f32.mrf.mxu0
  %v261 = vadd.f32 %v59, %v260
  %v262 = vpop.f32.mrf.mxu0
  %v263 = vpop.f32.mrf.mxu0
  %v264 = vadd.f32 %v59, %v263
  %v265 = vpop.f32.mrf.mxu0
  %266 = vmatprep.mubr.bf16.mxu0 0
  %267 = vmatmul.mubr.bf16.gmra.mxu0 %v158
  %v268 = vpop.f32.mrf.mxu0
  %v269 = vadd.f32 %v59, %v268
  %v270 = vpop.f32.mrf.mxu0
  %v271 = vpop.f32.mrf.mxu0
  %v272 = vadd.f32 %v59, %v271
  %v273 = vpop.f32.mrf.mxu0
  %274 = vmatprep.mubr.bf16.mxu0 0
  %275 = vmatmul.mubr.bf16.gmra.mxu0 %v161
  %v276 = vpop.f32.mrf.mxu0
  %v277 = vadd.f32 %v59, %v276
  %v278 = vpop.f32.mrf.mxu0
  %v279 = vpop.f32.mrf.mxu0
  %v280 = vadd.f32 %v59, %v279
  %v281 = vpop.f32.mrf.mxu0
  %282 = vmatprep.mubr.bf16.mxu0 0
  %283 = vmatmul.mubr.bf16.gmra.mxu0 %v164
  %v284 = vpop.f32.mrf.mxu0
  %v285 = vadd.f32 %v59, %v284
  %v286 = vpop.f32.mrf.mxu0
  %v287 = vpop.f32.mrf.mxu0
  %v288 = vadd.f32 %v59, %v287
  %v289 = vpop.f32.mrf.mxu0
  %290 = vmatprep.mubr.bf16.mxu0 0
  %291 = vmatmul.mubr.bf16.gmra.mxu0 %v167
  %v292 = vpop.f32.mrf.mxu0
  %v293 = vadd.f32 %v59, %v292
  %v294 = vpop.f32.mrf.mxu0
  %v295 = vpop.f32.mrf.mxu0
  %v296 = vadd.f32 %v59, %v295
  %v297 = vpop.f32.mrf.mxu0
  %298 = vmatprep.mubr.bf16.mxu0 0
  %299 = vmatmul.mubr.bf16.gmra.mxu0 %v170
  %v300 = vpop.f32.mrf.mxu0
  %v301 = vadd.f32 %v59, %v300
  %v302 = vpop.f32.mrf.mxu0
  %v303 = vpop.f32.mrf.mxu0
  %v304 = vadd.f32 %v59, %v303
  %v305 = vpop.f32.mrf.mxu0
  %306 = vmatprep.mubr.bf16.mxu0 0
  %307 = vmatmul.mubr.bf16.gmra.mxu0 %v173
  %v308 = vpop.f32.mrf.mxu0
  %v309 = vadd.f32 %v59, %v308
  %v310 = vpop.f32.mrf.mxu0
  %v311 = vpop.f32.mrf.mxu0
  %v312 = vadd.f32 %v59, %v311
  %v313 = vpop.f32.mrf.mxu0
  %314 = vmatprep.mubr.bf16.mxu0 0
  %315 = vmatmul.mubr.bf16.gmra.mxu0 %v176
  %v316 = vpop.f32.mrf.mxu0
  %v317 = vadd.f32 %v59, %v316
  %v318 = vpop.f32.mrf.mxu0
  %v319 = vpop.f32.mrf.mxu0
  %v320 = vadd.f32 %v59, %v319
  %v321 = vpop.f32.mrf.mxu0
  %322 = vmatprep.mubr.bf16.mxu0 0
  %323 = vmatmul.mubr.bf16.gmra.mxu0 %v179
  %v324 = vpop.f32.mrf.mxu0
  %v325 = vadd.f32 %v59, %v324
  %v326 = vpop.f32.mrf.mxu0
  %v327 = vpop.f32.mrf.mxu0
  %v328 = vadd.f32 %v59, %v327
  %v329 = vpop.f32.mrf.mxu0
  %330 = vmatprep.mubr.bf16.mxu0 0
  %331 = vmatmul.mubr.bf16.gmra.mxu0 %v182
  %v332 = vpop.f32.mrf.mxu0
  %v333 = vadd.f32 %v59, %v332
  %v334 = vpop.f32.mrf.mxu0
  %v335 = vpop.f32.mrf.mxu0
  %v336 = vadd.f32 %v59, %v335
  %v337 = vpop.f32.mrf.mxu0
  %338 = vmatprep.mubr.bf16.mxu0 0
  %339 = vmatmul.mubr.bf16.gmra.mxu0 %v185
  %v340 = vpop.f32.mrf.mxu0
  %v341 = vadd.f32 %v59, %v340
  %v342 = vpop.f32.mrf.mxu0
  %v343 = vpop.f32.mrf.mxu0
  %v344 = vadd.f32 %v59, %v343
  %v345 = vpop.f32.mrf.mxu0
  %346 = vmatprep.mubr.bf16.mxu0 0
  %347 = vmatmul.mubr.bf16.gmra.mxu0 %v188
  %v348 = vpop.f32.mrf.mxu0
  %v349 = vadd.f32 %v59, %v348
  %v350 = vpop.f32.mrf.mxu0
  %v351 = vpop.f32.mrf.mxu0
  %v352 = vadd.f32 %v59, %v351
  %v353 = vpop.f32.mrf.mxu0
  %354 = vdwg.mxu0
  %v355 = vmax.f32 %v229, 0.0
  %v356 = vmax.f32 %v232, 0.0
  %v357 = vmax.f32 %v237, 0.0
  %v358 = vmax.f32 %v240, 0.0
  %v359 = vmax.f32 %v245, 0.0
  %v360 = vmax.f32 %v248, 0.0
  %v361 = vmax.f32 %v253, 0.0
  %v362 = vmax.f32 %v256, 0.0
  %v363 = vmax.f32 %v261, 0.0
  %v364 = vmax.f32 %v264, 0.0
  %v365 = vmax.f32 %v269, 0.0
  %v366 = vmax.f32 %v272, 0.0
  %v367 = vmax.f32 %v277, 0.0
  %v368 = vmax.f32 %v280, 0.0
  %v369 = vmax.f32 %v285, 0.0
  %v370 = vmax.f32 %v288, 0.0
  %v371 = vmax.f32 %v293, 0.0
  %v372 = vmax.f32 %v296, 0.0
  %v373 = vmax.f32 %v301, 0.0
  %v374 = vmax.f32 %v304, 0.0
  %v375 = vmax.f32 %v309, 0.0
  %v376 = vmax.f32 %v312, 0.0
  %v377 = vmax.f32 %v317, 0.0
  %v378 = vmax.f32 %v320, 0.0
  %v379 = vmax.f32 %v325, 0.0
  %v380 = vmax.f32 %v328, 0.0
  %v381 = vmax.f32 %v333, 0.0
  %v382 = vmax.f32 %v336, 0.0
  %v383 = vmax.f32 %v341, 0.0
  %v384 = vmax.f32 %v344, 0.0
  %v385 = vmax.f32 %v349, 0.0
  %v386 = vmax.f32 %v352, 0.0
  %v387 = vpack.c.bf16 %v356, %v355
  %v388 = vpack.c.bf16 %v358, %v357
  %v389 = vpack.c.bf16 %v360, %v359
  %v390 = vpack.c.bf16 %v362, %v361
  %v391 = vpack.c.bf16 %v364, %v363
  %v392 = vpack.c.bf16 %v366, %v365
  %v393 = vpack.c.bf16 %v368, %v367
  %v394 = vpack.c.bf16 %v370, %v369
  %v395 = vpack.c.bf16 %v372, %v371
  %v396 = vpack.c.bf16 %v374, %v373
  %v397 = vpack.c.bf16 %v376, %v375
  %v398 = vpack.c.bf16 %v378, %v377
  %v399 = vpack.c.bf16 %v380, %v379
  %v400 = vpack.c.bf16 %v382, %v381
  %v401 = vpack.c.bf16 %v384, %v383
  %v402 = vpack.c.bf16 %v386, %v385
  %v403 = vld [vmem:[%s3] sm:$0xf]
  %v404 = vld [vmem:[%s3 + $0x4] sm:$0xf]
  %v405 = vld [vmem:[%s4] sm:$0x1]
  %v407 = vlaneseq
  %v408 = vshrl.u32 %v407, 7
  %v409 = vsub.s32 0, %v408
  %v410 = vrot.slane %v405, %v409
  %v414 = vunpack.c.l.b16 %v403
  %v415 = vunpack.c.l.b16 %v404
  %v416 = vpack.c.b16 %v415, %v414
  %vm418 = vcmask 130048
  %v420 = vsel %vm418, %v387, 0
  %v423 = vsel %vm418, %v388, 0
  %v426 = vsel %vm418, %v389, 0
  %v429 = vsel %vm418, %v390, 0
  %v432 = vsel %vm418, %v391, 0
  %v435 = vsel %vm418, %v392, 0
  %v438 = vsel %vm418, %v393, 0
  %v441 = vsel %vm418, %v394, 0
  %v444 = vsel %vm418, %v395, 0
  %v447 = vsel %vm418, %v396, 0
  %v450 = vsel %vm418, %v397, 0
  %v453 = vsel %vm418, %v398, 0
  %v456 = vsel %vm418, %v399, 0
  %v459 = vsel %vm418, %v400, 0
  %v462 = vsel %vm418, %v401, 0
  %v465 = vsel %vm418, %v402, 0
  %467 = vmatprep.subr.bf16.mxu0 0
  %468 = vmatpush1.bf16.msra.mxu0 0
  %469 = vmatprep.subr.bf16.mxu0 0
  %470 = vmatpush1.bf16.msra.mxu0 0
  %471 = vmatprep.subr.bf16.mxu0 0
  %472 = vmatpush1.bf16.msra.mxu0 0
  %473 = vmatprep.subr.bf16.mxu0 0
  %474 = vmatpush1.bf16.msra.mxu0 0
  %475 = vmatprep.subr.bf16.mxu0 0
  %476 = vmatpush1.bf16.msra.mxu0 0
  %477 = vmatprep.subr.bf16.mxu0 0
  %478 = vmatpush1.bf16.msra.mxu0 0
  %479 = vmatprep.subr.bf16.mxu0 0
  %480 = vmatpush1.bf16.msra.mxu0 0
  %481 = vmatprep.subr.bf16.mxu0 0
  %482 = vmatpush1.bf16.msra.mxu0 %v416
  %483 = vmatprep.subr.bf16.mxu0 0
  %484 = vmatpush2.bf16.msra.mxu0 0
  %485 = vmatprep.subr.bf16.mxu0 0
  %486 = vmatpush2.bf16.msra.mxu0 0
  %487 = vmatprep.subr.bf16.mxu0 0
  %488 = vmatpush2.bf16.msra.mxu0 0
  %489 = vmatprep.subr.bf16.mxu0 0
  %490 = vmatpush2.bf16.msra.mxu0 0
  %491 = vmatprep.subr.bf16.mxu0 0
  %492 = vmatpush2.bf16.msra.mxu0 0
  %493 = vmatprep.subr.bf16.mxu0 0
  %494 = vmatpush2.bf16.msra.mxu0 0
  %495 = vmatprep.subr.bf16.mxu0 0
  %496 = vmatpush2.bf16.msra.mxu0 0
  %497 = vmatprep.subr.bf16.mxu0 0
  %498 = vmatpush2.bf16.msra.mxu0 0
  %499 = vmatprep.mubr.bf16.mxu0 0
  %500 = vmatmul.mubr.bf16.gmra.mxu0 %v420
  %v501 = vpop.f32.mrf.mxu0
  %v502 = vadd.f32 %v410, %v501
  %v503 = vpop.f32.mrf.mxu0
  %v504 = vpop.f32.mrf.mxu0
  %v505 = vadd.f32 %v410, %v504
  %v506 = vpop.f32.mrf.mxu0
  %507 = vmatprep.mubr.bf16.mxu0 0
  %508 = vmatmul.mubr.bf16.gmra.mxu0 %v423
  %v509 = vpop.f32.mrf.mxu0
  %v510 = vadd.f32 %v410, %v509
  %v511 = vpop.f32.mrf.mxu0
  %v512 = vpop.f32.mrf.mxu0
  %v513 = vadd.f32 %v410, %v512
  %v514 = vpop.f32.mrf.mxu0
  %515 = vmatprep.mubr.bf16.mxu0 0
  %516 = vmatmul.mubr.bf16.gmra.mxu0 %v426
  %v517 = vpop.f32.mrf.mxu0
  %v518 = vadd.f32 %v410, %v517
  %v519 = vpop.f32.mrf.mxu0
  %v520 = vpop.f32.mrf.mxu0
  %v521 = vadd.f32 %v410, %v520
  %v522 = vpop.f32.mrf.mxu0
  %523 = vmatprep.mubr.bf16.mxu0 0
  %524 = vmatmul.mubr.bf16.gmra.mxu0 %v429
  %v525 = vpop.f32.mrf.mxu0
  %v526 = vadd.f32 %v410, %v525
  %v527 = vpop.f32.mrf.mxu0
  %v528 = vpop.f32.mrf.mxu0
  %v529 = vadd.f32 %v410, %v528
  %v530 = vpop.f32.mrf.mxu0
  %531 = vmatprep.mubr.bf16.mxu0 0
  %532 = vmatmul.mubr.bf16.gmra.mxu0 %v432
  %v533 = vpop.f32.mrf.mxu0
  %v534 = vadd.f32 %v410, %v533
  %v535 = vpop.f32.mrf.mxu0
  %v536 = vpop.f32.mrf.mxu0
  %v537 = vadd.f32 %v410, %v536
  %v538 = vpop.f32.mrf.mxu0
  %539 = vmatprep.mubr.bf16.mxu0 0
  %540 = vmatmul.mubr.bf16.gmra.mxu0 %v435
  %v541 = vpop.f32.mrf.mxu0
  %v542 = vadd.f32 %v410, %v541
  %v543 = vpop.f32.mrf.mxu0
  %v544 = vpop.f32.mrf.mxu0
  %v545 = vadd.f32 %v410, %v544
  %v546 = vpop.f32.mrf.mxu0
  %547 = vmatprep.mubr.bf16.mxu0 0
  %548 = vmatmul.mubr.bf16.gmra.mxu0 %v438
  %v549 = vpop.f32.mrf.mxu0
  %v550 = vadd.f32 %v410, %v549
  %v551 = vpop.f32.mrf.mxu0
  %v552 = vpop.f32.mrf.mxu0
  %v553 = vadd.f32 %v410, %v552
  %v554 = vpop.f32.mrf.mxu0
  %555 = vmatprep.mubr.bf16.mxu0 0
  %556 = vmatmul.mubr.bf16.gmra.mxu0 %v441
  %v557 = vpop.f32.mrf.mxu0
  %v558 = vadd.f32 %v410, %v557
  %v559 = vpop.f32.mrf.mxu0
  %v560 = vpop.f32.mrf.mxu0
  %v561 = vadd.f32 %v410, %v560
  %v562 = vpop.f32.mrf.mxu0
  %563 = vmatprep.mubr.bf16.mxu0 0
  %564 = vmatmul.mubr.bf16.gmra.mxu0 %v444
  %v565 = vpop.f32.mrf.mxu0
  %v566 = vadd.f32 %v410, %v565
  %v567 = vpop.f32.mrf.mxu0
  %v568 = vpop.f32.mrf.mxu0
  %v569 = vadd.f32 %v410, %v568
  %v570 = vpop.f32.mrf.mxu0
  %571 = vmatprep.mubr.bf16.mxu0 0
  %572 = vmatmul.mubr.bf16.gmra.mxu0 %v447
  %v573 = vpop.f32.mrf.mxu0
  %v574 = vadd.f32 %v410, %v573
  %v575 = vpop.f32.mrf.mxu0
  %v576 = vpop.f32.mrf.mxu0
  %v577 = vadd.f32 %v410, %v576
  %v578 = vpop.f32.mrf.mxu0
  %579 = vmatprep.mubr.bf16.mxu0 0
  %580 = vmatmul.mubr.bf16.gmra.mxu0 %v450
  %v581 = vpop.f32.mrf.mxu0
  %v582 = vadd.f32 %v410, %v581
  %v583 = vpop.f32.mrf.mxu0
  %v584 = vpop.f32.mrf.mxu0
  %v585 = vadd.f32 %v410, %v584
  %v586 = vpop.f32.mrf.mxu0
  %587 = vmatprep.mubr.bf16.mxu0 0
  %588 = vmatmul.mubr.bf16.gmra.mxu0 %v453
  %v589 = vpop.f32.mrf.mxu0
  %v590 = vadd.f32 %v410, %v589
  %v591 = vpop.f32.mrf.mxu0
  %v592 = vpop.f32.mrf.mxu0
  %v593 = vadd.f32 %v410, %v592
  %v594 = vpop.f32.mrf.mxu0
  %595 = vmatprep.mubr.bf16.mxu0 0
  %596 = vmatmul.mubr.bf16.gmra.mxu0 %v456
  %v597 = vpop.f32.mrf.mxu0
  %v598 = vadd.f32 %v410, %v597
  %v599 = vpop.f32.mrf.mxu0
  %v600 = vpop.f32.mrf.mxu0
  %v601 = vadd.f32 %v410, %v600
  %v602 = vpop.f32.mrf.mxu0
  %603 = vmatprep.mubr.bf16.mxu0 0
  %604 = vmatmul.mubr.bf16.gmra.mxu0 %v459
  %v605 = vpop.f32.mrf.mxu0
  %v606 = vadd.f32 %v410, %v605
  %v607 = vpop.f32.mrf.mxu0
  %v608 = vpop.f32.mrf.mxu0
  %v609 = vadd.f32 %v410, %v608
  %v610 = vpop.f32.mrf.mxu0
  %611 = vmatprep.mubr.bf16.mxu0 0
  %612 = vmatmul.mubr.bf16.gmra.mxu0 %v462
  %v613 = vpop.f32.mrf.mxu0
  %v614 = vadd.f32 %v410, %v613
  %v615 = vpop.f32.mrf.mxu0
  %v616 = vpop.f32.mrf.mxu0
  %v617 = vadd.f32 %v410, %v616
  %v618 = vpop.f32.mrf.mxu0
  %619 = vmatprep.mubr.bf16.mxu0 0
  %620 = vmatmul.mubr.bf16.gmra.mxu0 %v465
  %v621 = vpop.f32.mrf.mxu0
  %v622 = vadd.f32 %v410, %v621
  %v623 = vpop.f32.mrf.mxu0
  %v624 = vpop.f32.mrf.mxu0
  %v625 = vadd.f32 %v410, %v624
  %v626 = vpop.f32.mrf.mxu0
  %627 = vdwg.mxu0
  %v628 = vmax.f32 %v502, 0.0
  %v629 = vmax.f32 %v505, 0.0
  %v630 = vmax.f32 %v510, 0.0
  %v631 = vmax.f32 %v513, 0.0
  %v632 = vmax.f32 %v518, 0.0
  %v633 = vmax.f32 %v521, 0.0
  %v634 = vmax.f32 %v526, 0.0
  %v635 = vmax.f32 %v529, 0.0
  %v636 = vmax.f32 %v534, 0.0
  %v637 = vmax.f32 %v537, 0.0
  %v638 = vmax.f32 %v542, 0.0
  %v639 = vmax.f32 %v545, 0.0
  %v640 = vmax.f32 %v550, 0.0
  %v641 = vmax.f32 %v553, 0.0
  %v642 = vmax.f32 %v558, 0.0
  %v643 = vmax.f32 %v561, 0.0
  %v644 = vmax.f32 %v566, 0.0
  %v645 = vmax.f32 %v569, 0.0
  %v646 = vmax.f32 %v574, 0.0
  %v647 = vmax.f32 %v577, 0.0
  %v648 = vmax.f32 %v582, 0.0
  %v649 = vmax.f32 %v585, 0.0
  %v650 = vmax.f32 %v590, 0.0
  %v651 = vmax.f32 %v593, 0.0
  %v652 = vmax.f32 %v598, 0.0
  %v653 = vmax.f32 %v601, 0.0
  %v654 = vmax.f32 %v606, 0.0
  %v655 = vmax.f32 %v609, 0.0
  %v656 = vmax.f32 %v614, 0.0
  %v657 = vmax.f32 %v617, 0.0
  %v658 = vmax.f32 %v622, 0.0
  %v659 = vmax.f32 %v625, 0.0
  %vm660 = vcmask 261120
  %v661 = vsel %vm660, %v628, -inf
  %v662 = vrot.slane %v661, 4
  %v663 = vmax.f32 %v661, %v662
  %v664 = vrot.slane %v663, 2
  %v665 = vmax.f32 %v663, %v664
  %v666 = vrot.slane %v665, 1
  %v667 = vmax.f32 %v665, %v666
  %v668 = vsel %vm660, %v629, -inf
  %v669 = vrot.slane %v668, 4
  %v670 = vmax.f32 %v668, %v669
  %v671 = vrot.slane %v670, 2
  %v672 = vmax.f32 %v670, %v671
  %v673 = vrot.slane %v672, 1
  %v674 = vmax.f32 %v672, %v673
  %v675 = vsel %vm660, %v630, -inf
  %v676 = vrot.slane %v675, 4
  %v677 = vmax.f32 %v675, %v676
  %v678 = vrot.slane %v677, 2
  %v679 = vmax.f32 %v677, %v678
  %v680 = vrot.slane %v679, 1
  %v681 = vmax.f32 %v679, %v680
  %v682 = vsel %vm660, %v631, -inf
  %v683 = vrot.slane %v682, 4
  %v684 = vmax.f32 %v682, %v683
  %v685 = vrot.slane %v684, 2
  %v686 = vmax.f32 %v684, %v685
  %v687 = vrot.slane %v686, 1
  %v688 = vmax.f32 %v686, %v687
  %v689 = vsel %vm660, %v632, -inf
  %v690 = vrot.slane %v689, 4
  %v691 = vmax.f32 %v689, %v690
  %v692 = vrot.slane %v691, 2
  %v693 = vmax.f32 %v691, %v692
  %v694 = vrot.slane %v693, 1
  %v695 = vmax.f32 %v693, %v694
  %v696 = vsel %vm660, %v633, -inf
  %v697 = vrot.slane %v696, 4
  %v698 = vmax.f32 %v696, %v697
  %v699 = vrot.slane %v698, 2
  %v700 = vmax.f32 %v698, %v699
  %v701 = vrot.slane %v700, 1
  %v702 = vmax.f32 %v700, %v701
  %v703 = vsel %vm660, %v634, -inf
  %v704 = vrot.slane %v703, 4
  %v705 = vmax.f32 %v703, %v704
  %v706 = vrot.slane %v705, 2
  %v707 = vmax.f32 %v705, %v706
  %v708 = vrot.slane %v707, 1
  %v709 = vmax.f32 %v707, %v708
  %v710 = vsel %vm660, %v635, -inf
  %v711 = vrot.slane %v710, 4
  %v712 = vmax.f32 %v710, %v711
  %v713 = vrot.slane %v712, 2
  %v714 = vmax.f32 %v712, %v713
  %v715 = vrot.slane %v714, 1
  %v716 = vmax.f32 %v714, %v715
  %v717 = vsel %vm660, %v636, -inf
  %v718 = vrot.slane %v717, 4
  %v719 = vmax.f32 %v717, %v718
  %v720 = vrot.slane %v719, 2
  %v721 = vmax.f32 %v719, %v720
  %v722 = vrot.slane %v721, 1
  %v723 = vmax.f32 %v721, %v722
  %v724 = vsel %vm660, %v637, -inf
  %v725 = vrot.slane %v724, 4
  %v726 = vmax.f32 %v724, %v725
  %v727 = vrot.slane %v726, 2
  %v728 = vmax.f32 %v726, %v727
  %v729 = vrot.slane %v728, 1
  %v730 = vmax.f32 %v728, %v729
  %v731 = vsel %vm660, %v638, -inf
  %v732 = vrot.slane %v731, 4
  %v733 = vmax.f32 %v731, %v732
  %v734 = vrot.slane %v733, 2
  %v735 = vmax.f32 %v733, %v734
  %v736 = vrot.slane %v735, 1
  %v737 = vmax.f32 %v735, %v736
  %v738 = vsel %vm660, %v639, -inf
  %v739 = vrot.slane %v738, 4
  %v740 = vmax.f32 %v738, %v739
  %v741 = vrot.slane %v740, 2
  %v742 = vmax.f32 %v740, %v741
  %v743 = vrot.slane %v742, 1
  %v744 = vmax.f32 %v742, %v743
  %v745 = vsel %vm660, %v640, -inf
  %v746 = vrot.slane %v745, 4
  %v747 = vmax.f32 %v745, %v746
  %v748 = vrot.slane %v747, 2
  %v749 = vmax.f32 %v747, %v748
  %v750 = vrot.slane %v749, 1
  %v751 = vmax.f32 %v749, %v750
  %v752 = vsel %vm660, %v641, -inf
  %v753 = vrot.slane %v752, 4
  %v754 = vmax.f32 %v752, %v753
  %v755 = vrot.slane %v754, 2
  %v756 = vmax.f32 %v754, %v755
  %v757 = vrot.slane %v756, 1
  %v758 = vmax.f32 %v756, %v757
  %v759 = vsel %vm660, %v642, -inf
  %v760 = vrot.slane %v759, 4
  %v761 = vmax.f32 %v759, %v760
  %v762 = vrot.slane %v761, 2
  %v763 = vmax.f32 %v761, %v762
  %v764 = vrot.slane %v763, 1
  %v765 = vmax.f32 %v763, %v764
  %v766 = vsel %vm660, %v643, -inf
  %v767 = vrot.slane %v766, 4
  %v768 = vmax.f32 %v766, %v767
  %v769 = vrot.slane %v768, 2
  %v770 = vmax.f32 %v768, %v769
  %v771 = vrot.slane %v770, 1
  %v772 = vmax.f32 %v770, %v771
  %v773 = vsel %vm660, %v644, -inf
  %v774 = vrot.slane %v773, 4
  %v775 = vmax.f32 %v773, %v774
  %v776 = vrot.slane %v775, 2
  %v777 = vmax.f32 %v775, %v776
  %v778 = vrot.slane %v777, 1
  %v779 = vmax.f32 %v777, %v778
  %v780 = vsel %vm660, %v645, -inf
  %v781 = vrot.slane %v780, 4
  %v782 = vmax.f32 %v780, %v781
  %v783 = vrot.slane %v782, 2
  %v784 = vmax.f32 %v782, %v783
  %v785 = vrot.slane %v784, 1
  %v786 = vmax.f32 %v784, %v785
  %v787 = vsel %vm660, %v646, -inf
  %v788 = vrot.slane %v787, 4
  %v789 = vmax.f32 %v787, %v788
  %v790 = vrot.slane %v789, 2
  %v791 = vmax.f32 %v789, %v790
  %v792 = vrot.slane %v791, 1
  %v793 = vmax.f32 %v791, %v792
  %v794 = vsel %vm660, %v647, -inf
  %v795 = vrot.slane %v794, 4
  %v796 = vmax.f32 %v794, %v795
  %v797 = vrot.slane %v796, 2
  %v798 = vmax.f32 %v796, %v797
  %v799 = vrot.slane %v798, 1
  %v800 = vmax.f32 %v798, %v799
  %v801 = vsel %vm660, %v648, -inf
  %v802 = vrot.slane %v801, 4
  %v803 = vmax.f32 %v801, %v802
  %v804 = vrot.slane %v803, 2
  %v805 = vmax.f32 %v803, %v804
  %v806 = vrot.slane %v805, 1
  %v807 = vmax.f32 %v805, %v806
  %v808 = vsel %vm660, %v649, -inf
  %v809 = vrot.slane %v808, 4
  %v810 = vmax.f32 %v808, %v809
  %v811 = vrot.slane %v810, 2
  %v812 = vmax.f32 %v810, %v811
  %v813 = vrot.slane %v812, 1
  %v814 = vmax.f32 %v812, %v813
  %v815 = vsel %vm660, %v650, -inf
  %v816 = vrot.slane %v815, 4
  %v817 = vmax.f32 %v815, %v816
  %v818 = vrot.slane %v817, 2
  %v819 = vmax.f32 %v817, %v818
  %v820 = vrot.slane %v819, 1
  %v821 = vmax.f32 %v819, %v820
  %v822 = vsel %vm660, %v651, -inf
  %v823 = vrot.slane %v822, 4
  %v824 = vmax.f32 %v822, %v823
  %v825 = vrot.slane %v824, 2
  %v826 = vmax.f32 %v824, %v825
  %v827 = vrot.slane %v826, 1
  %v828 = vmax.f32 %v826, %v827
  %v829 = vsel %vm660, %v652, -inf
  %v830 = vrot.slane %v829, 4
  %v831 = vmax.f32 %v829, %v830
  %v832 = vrot.slane %v831, 2
  %v833 = vmax.f32 %v831, %v832
  %v834 = vrot.slane %v833, 1
  %v835 = vmax.f32 %v833, %v834
  %v836 = vsel %vm660, %v653, -inf
  %v837 = vrot.slane %v836, 4
  %v838 = vmax.f32 %v836, %v837
  %v839 = vrot.slane %v838, 2
  %v840 = vmax.f32 %v838, %v839
  %v841 = vrot.slane %v840, 1
  %v842 = vmax.f32 %v840, %v841
  %v843 = vsel %vm660, %v654, -inf
  %v844 = vrot.slane %v843, 4
  %v845 = vmax.f32 %v843, %v844
  %v846 = vrot.slane %v845, 2
  %v847 = vmax.f32 %v845, %v846
  %v848 = vrot.slane %v847, 1
  %v849 = vmax.f32 %v847, %v848
  %v850 = vsel %vm660, %v655, -inf
  %v851 = vrot.slane %v850, 4
  %v852 = vmax.f32 %v850, %v851
  %v853 = vrot.slane %v852, 2
  %v854 = vmax.f32 %v852, %v853
  %v855 = vrot.slane %v854, 1
  %v856 = vmax.f32 %v854, %v855
  %v857 = vsel %vm660, %v656, -inf
  %v858 = vrot.slane %v857, 4
  %v859 = vmax.f32 %v857, %v858
  %v860 = vrot.slane %v859, 2
  %v861 = vmax.f32 %v859, %v860
  %v862 = vrot.slane %v861, 1
  %v863 = vmax.f32 %v861, %v862
  %v864 = vsel %vm660, %v657, -inf
  %v865 = vrot.slane %v864, 4
  %v866 = vmax.f32 %v864, %v865
  %v867 = vrot.slane %v866, 2
  %v868 = vmax.f32 %v866, %v867
  %v869 = vrot.slane %v868, 1
  %v870 = vmax.f32 %v868, %v869
  %v871 = vsel %vm660, %v658, -inf
  %v872 = vrot.slane %v871, 4
  %v873 = vmax.f32 %v871, %v872
  %v874 = vrot.slane %v873, 2
  %v875 = vmax.f32 %v873, %v874
  %v876 = vrot.slane %v875, 1
  %v877 = vmax.f32 %v875, %v876
  %v878 = vsel %vm660, %v659, -inf
  %v879 = vrot.slane %v878, 4
  %v880 = vmax.f32 %v878, %v879
  %v881 = vrot.slane %v880, 2
  %v882 = vmax.f32 %v880, %v881
  %v883 = vrot.slane %v882, 1
  %v884 = vmax.f32 %v882, %v883
  %vm893 = vcmask 1041409
  %v894 = vsel %vm893, %v674, %v667
  %vm895 = vcmask 1042434
  %v896 = vsel %vm895, %v681, %v894
  %vm897 = vcmask 1043459
  %v898 = vsel %vm897, %v688, %v896
  %vm899 = vcmask 1044484
  %v900 = vsel %vm899, %v695, %v898
  %vm901 = vcmask 1045509
  %v902 = vsel %vm901, %v702, %v900
  %vm903 = vcmask 1046534
  %v904 = vsel %vm903, %v709, %v902
  %vm905 = vcmask 1047559
  %v906 = vsel %vm905, %v716, %v904
  %v916 = vsel %vm893, %v730, %v723
  %v917 = vsel %vm895, %v737, %v916
  %v918 = vsel %vm897, %v744, %v917
  %v919 = vsel %vm899, %v751, %v918
  %v920 = vsel %vm901, %v758, %v919
  %v921 = vsel %vm903, %v765, %v920
  %v922 = vsel %vm905, %v772, %v921
  %923 = vrot.lane.b32.xlu0 %v922, 32
  %v924 = vpop.permute.xlu0 %923
  %v934 = vsel %vm893, %v786, %v779
  %v935 = vsel %vm895, %v793, %v934
  %v936 = vsel %vm897, %v800, %v935
  %v937 = vsel %vm899, %v807, %v936
  %v938 = vsel %vm901, %v814, %v937
  %v939 = vsel %vm903, %v821, %v938
  %v940 = vsel %vm905, %v828, %v939
  %941 = vrot.lane.b32.xlu0 %v940, 64
  %v942 = vpop.permute.xlu0 %941
  %v952 = vsel %vm893, %v842, %v835
  %v953 = vsel %vm895, %v849, %v952
  %v954 = vsel %vm897, %v856, %v953
  %v955 = vsel %vm899, %v863, %v954
  %v956 = vsel %vm901, %v870, %v955
  %v957 = vsel %vm903, %v877, %v956
  %v958 = vsel %vm905, %v884, %v957
  %959 = vrot.lane.b32.xlu0 %v958, 96
  %v960 = vpop.permute.xlu0 %959
  %v962 = vsel %vm660, %v906, %v924
  %vm963 = vcmask 523264
  %v964 = vsel %vm963, %v962, %v942
  %vm965 = vcmask 785408
  %v966 = vsel %vm965, %v964, %v960
  %967 = vst [vmem:[%s5] sm:$0xff] %v966
  // Predicated region
  $region22: #{_lambda_.1} parent=0 // pred_check
    _
  $region23: #{_lambda_.1} parent=0 // pred_check_branch
    %969 = sbr.rel (0) target = $region25
  $region24: #{_lambda_.1} parent=0 // pred_region
    _
  $region25: #{_lambda_.1} parent=0 // pred_fallthru
    _
  // Predicated region
  $region26: #{_lambda_.1} parent=0 // pred_check
    _
  $region27: #{_lambda_.1} parent=0 // pred_check_branch
    %971 = sbr.rel (0) target = $region29
  $region28: #{_lambda_.1} parent=0 // pred_region
    _
  $region29: #{_lambda_.1} parent=0 // pred_fallthru
    _

</llo_original>
